<compile_context>
chip_gen: v6e
topology: v6e:2x2x1
jax: 0.10.0
libtpu: 0.0.40
codegen_flags: <defaults>
</compile_context>

<pallas_src>
import jax
import jax.numpy as jnp
from jax.experimental import pallas as pl
from jax.experimental.pallas import tpu as pltpu

BN_EPS = 1e-5
NEG_BIG = -1e30  # bias for padded output columns; exp(NEG_BIG - m) underflows to 0


def _round_up(a, b):
    return ((a + b - 1) // b) * b


# ---------------------------------------------------------------------------
# Fused kernel: (num_hidden x [matmul + bias + relu]) -> matmul + bias -> log_softmax
# ---------------------------------------------------------------------------
def make_fused_mlp_kernel(num_hidden):
    def kernel(x_ref, *refs):
        o_ref = refs[-1]
        wb = refs[:-1]                      # [w0, b0, w1, b1, ..., w_last, b_last]
        h = x_ref[...]
        for li in range(num_hidden):
            w = wb[2 * li][...]
            b = wb[2 * li + 1][...]         # (1, d_out) f32, BN already folded in
            y = jnp.dot(h.astype(w.dtype), w,
                        preferred_element_type=jnp.float32) + b
            h = jnp.maximum(y, 0.0)
            # F.dropout(training=False) is identity at inference -> nothing to do.
        w_last = wb[-2][...]
        b_last = wb[-1][...]
        z = jnp.dot(h.astype(w_last.dtype), w_last,
                    preferred_element_type=jnp.float32) + b_last
        m = jnp.max(z, axis=-1, keepdims=True)
        lse = jnp.log(jnp.sum(jnp.exp(z - m), axis=-1, keepdims=True)) + m
        o_ref[...] = z - lse                # log_softmax(dim=-1); lane-dense store
    return kernel


# ---------------------------------------------------------------------------
# Wrapper: fold BN, pad for tiling / lane density, single pallas_call
# ---------------------------------------------------------------------------
def mlp_forward(x, params, *, tm=128, use_bf16_matmul=False):
    hidden_layers, (w_last, b_last) = params
    n, d_in = x.shape
    mxu_dtype = jnp.bfloat16 if use_bf16_matmul else jnp.float32

    # --- fold BatchNorm (running stats) into each hidden Linear ----------------
    folded = []
    for (w_t, b, gamma, beta, mean, var) in hidden_layers:
        scale = gamma * jax.lax.rsqrt(var + BN_EPS)            # (1, d_out)
        w_eff = (w_t * scale).astype(mxu_dtype)                # (d_in, d_out)
        b_eff = ((b - mean) * scale + beta).astype(jnp.float32)
        folded.append((w_eff, b_eff))

    # --- pad final feature dim to a multiple of 128 (lane-dense output stores) -
    d_out = w_last.shape[1]
    d_out_pad = _round_up(d_out, 128)
    if d_out_pad != d_out:
        w_last_p = jnp.pad(w_last, ((0, 0), (0, d_out_pad - d_out)))
        b_last_p = jnp.pad(b_last, ((0, 0), (0, d_out_pad - d_out)),
                           constant_values=NEG_BIG)
    else:
        w_last_p, b_last_p = w_last, b_last
    w_last_p = w_last_p.astype(mxu_dtype)
    b_last_p = b_last_p.astype(jnp.float32)

    # --- batch tiling: tm = min(128, round_up(N, 8)); pad rows, no asserts -----
    tm = min(tm, _round_up(n, 8))
    n_pad = _round_up(n, tm)
    x_p = x.astype(mxu_dtype)
    if n_pad != n:
        x_p = jnp.pad(x_p, ((0, n_pad - n), (0, 0)))
    grid = (n_pad // tm,)

    def full_spec(arr):
        # whole array resident in VMEM, same block for every grid step
        return pl.BlockSpec(arr.shape, lambda i: (0, 0))

    in_specs = [pl.BlockSpec((tm, d_in), lambda i: (i, 0))]    # x batch tile
    args = [x_p]
    for (w, b) in folded:
        in_specs += [full_spec(w), full_spec(b)]
        args += [w, b]
    in_specs += [full_spec(w_last_p), full_spec(b_last_p)]
    args += [w_last_p, b_last_p]

    out = pl.pallas_call(
        make_fused_mlp_kernel(len(folded)),
        out_shape=jax.ShapeDtypeStruct((n_pad, d_out_pad), jnp.float32),
        grid=grid,
        in_specs=in_specs,
        out_specs=pl.BlockSpec((tm, d_out_pad), lambda i: (i, 0)),
        compiler_params=pltpu.CompilerParams(
            dimension_semantics=("parallel",)),
    )(*args)
    # TODO(synk): for hidden dims >~2-4K on v7x (64 MiB VMEM), weights would need
    # bf16 + a K-reduction grid axis instead of full-VMEM residency.
    return out[:n, :d_out]


# ---------------------------------------------------------------------------
# Parameter construction + pure-JAX reference
# ---------------------------------------------------------------------------
def make_params(key, in_channels, hidden_channels, out_channels, num_layers):
    dims = ([in_channels] + [hidden_channels] * (num_layers - 1)
            + [out_channels])
    hidden = []
    keys = jax.random.split(key, 4 * num_layers)
    k = 0
    for li in range(num_layers - 1):
        d_in, d_out = dims[li], dims[li + 1]
        w_t = jax.random.normal(keys[k], (d_in, d_out), jnp.float32) * 0.1; k += 1
        b = jax.random.normal(keys[k], (1, d_out), jnp.float32) * 0.1; k += 1
        gamma = 1.0 + 0.1 * jax.random.normal(keys[k], (1, d_out), jnp.float32); k += 1
        beta = 0.1 * jax.random.normal(keys[k], (1, d_out), jnp.float32); k += 1
        mean = jnp.zeros((1, d_out), jnp.float32) + 0.05
        var = jnp.ones((1, d_out), jnp.float32) * 1.2
        hidden.append((w_t, b, gamma, beta, mean, var))
    d_in, d_out = dims[-2], dims[-1]
    w_last = jax.random.normal(keys[k], (d_in, d_out), jnp.float32) * 0.1; k += 1
    b_last = jax.random.normal(keys[k], (1, d_out), jnp.float32) * 0.1
    return hidden, (w_last, b_last)


def mlp_reference(x, params):
    hidden_layers, (w_last, b_last) = params
    for (w_t, b, gamma, beta, mean, var) in hidden_layers:
        y = x @ w_t + b
        y = (y - mean) * (gamma / jnp.sqrt(var + BN_EPS)) + beta
        x = jnp.maximum(y, 0.0)
    z = x @ w_last + b_last
    return jax.nn.log_softmax(z, axis=-1)


if __name__ == "__main__":
    # small shapes consistent with the module:
    #   batch=16, in_channels=32, hidden_channels=64, out_channels=16,
    #   num_layers=3, dropout=0.5 (inactive in eval)
    key = jax.random.PRNGKey(0)
    kx, kp = jax.random.split(key)
    N, C_IN, C_HID, C_OUT, NUM_LAYERS = 16, 32, 64, 16, 3

    x = jax.random.normal(kx, (N, C_IN), jnp.float32)
    params = make_params(kp, C_IN, C_HID, C_OUT, NUM_LAYERS)

    out = mlp_forward(x, params)
    out = jax.block_until_ready(out)

    ref = mlp_reference(x, params)
    assert out.shape == (N, C_OUT)
    assert jnp.allclose(out, ref, rtol=1e-4, atol=1e-4), "mismatch vs reference"

    print("KERNEL_OK")
</pallas_src>

<mosaic_0001>
module attributes {stable_mosaic.version = 11 : i64} {
  func.func @kernel(%arg0: i32, %arg1: memref<16x32xf32, #tpu.memory_space<vmem>>, %arg2: memref<32x64xf32, #tpu.memory_space<vmem>>, %arg3: memref<1x64xf32, #tpu.memory_space<vmem>>, %arg4: memref<64x64xf32, #tpu.memory_space<vmem>>, %arg5: memref<1x64xf32, #tpu.memory_space<vmem>>, %arg6: memref<64x128xf32, #tpu.memory_space<vmem>>, %arg7: memref<1x128xf32, #tpu.memory_space<vmem>>, %arg8: memref<16x128xf32, #tpu.memory_space<vmem>>) attributes {dimension_semantics = [#tpu.dimension_semantics<parallel>], iteration_bounds = array<i64: 1>, scalar_prefetch = 0 : i64, scratch_operands = 0 : i64, tpu.core_type = #tpu.core_type<tc>, window_params = [{transform_indices = @transform_0, window_bounds = array<i64: 16, 32>}, {pipeline_mode = #tpu.pipeline_mode<synchronous>, transform_indices = @transform_1, window_bounds = array<i64: 32, 64>}, {pipeline_mode = #tpu.pipeline_mode<synchronous>, transform_indices = @transform_2, window_bounds = array<i64: 1, 64>}, {pipeline_mode = #tpu.pipeline_mode<synchronous>, transform_indices = @transform_3, window_bounds = array<i64: 64, 64>}, {pipeline_mode = #tpu.pipeline_mode<synchronous>, transform_indices = @transform_4, window_bounds = array<i64: 1, 64>}, {pipeline_mode = #tpu.pipeline_mode<synchronous>, transform_indices = @transform_5, window_bounds = array<i64: 64, 128>}, {pipeline_mode = #tpu.pipeline_mode<synchronous>, transform_indices = @transform_6, window_bounds = array<i64: 1, 128>}, {transform_indices = @transform_7, window_bounds = array<i64: 16, 128>}]} {
    %c0 = arith.constant 0 : index
    %c0_0 = arith.constant 0 : index
    %0 = vector.load %arg1[%c0, %c0_0] : memref<16x32xf32, #tpu.memory_space<vmem>>, vector<16x32xf32>
    %c0_1 = arith.constant 0 : index
    %c0_2 = arith.constant 0 : index
    %1 = vector.load %arg2[%c0_1, %c0_2] : memref<32x64xf32, #tpu.memory_space<vmem>>, vector<32x64xf32>
    %c0_3 = arith.constant 0 : index
    %c0_4 = arith.constant 0 : index
    %2 = vector.load %arg3[%c0_3, %c0_4] : memref<1x64xf32, #tpu.memory_space<vmem>>, vector<1x64xf32>
    %cst = arith.constant dense<0.000000e+00> : vector<16x64xf32>
    %3 = tpu.matmul %0, %1, %cst {dimension_numbers = #tpu.dot_dimension_numbers<[1], [0], [0], [1], [0, 0, 1, 1], [], []>} : vector<16x32xf32>, vector<32x64xf32>, vector<16x64xf32> -> vector<16x64xf32>
    %4 = vector.broadcast %2 : vector<1x64xf32> to vector<16x64xf32>
    %5 = arith.addf %3, %4 : vector<16x64xf32>
    %cst_5 = arith.constant 0.000000e+00 : f32
    %6 = vector.broadcast %cst_5 : f32 to vector<16x64xf32>
    %7 = arith.maximumf %5, %6 : vector<16x64xf32>
    %c0_6 = arith.constant 0 : index
    %c0_7 = arith.constant 0 : index
    %8 = vector.load %arg4[%c0_6, %c0_7] : memref<64x64xf32, #tpu.memory_space<vmem>>, vector<64x64xf32>
    %c0_8 = arith.constant 0 : index
    %c0_9 = arith.constant 0 : index
    %9 = vector.load %arg5[%c0_8, %c0_9] : memref<1x64xf32, #tpu.memory_space<vmem>>, vector<1x64xf32>
    %cst_10 = arith.constant dense<0.000000e+00> : vector<16x64xf32>
    %10 = tpu.matmul %7, %8, %cst_10 {dimension_numbers = #tpu.dot_dimension_numbers<[1], [0], [0], [1], [0, 0, 1, 1], [], []>} : vector<16x64xf32>, vector<64x64xf32>, vector<16x64xf32> -> vector<16x64xf32>
    %11 = vector.broadcast %9 : vector<1x64xf32> to vector<16x64xf32>
    %12 = arith.addf %10, %11 : vector<16x64xf32>
    %cst_11 = arith.constant 0.000000e+00 : f32
    %13 = vector.broadcast %cst_11 : f32 to vector<16x64xf32>
    %14 = arith.maximumf %12, %13 : vector<16x64xf32>
    %c0_12 = arith.constant 0 : index
    %c0_13 = arith.constant 0 : index
    %15 = vector.load %arg6[%c0_12, %c0_13] : memref<64x128xf32, #tpu.memory_space<vmem>>, vector<64x128xf32>
    %c0_14 = arith.constant 0 : index
    %c0_15 = arith.constant 0 : index
    %16 = vector.load %arg7[%c0_14, %c0_15] : memref<1x128xf32, #tpu.memory_space<vmem>>, vector<1x128xf32>
    %cst_16 = arith.constant dense<0.000000e+00> : vector<16x128xf32>
    %17 = tpu.matmul %14, %15, %cst_16 {dimension_numbers = #tpu.dot_dimension_numbers<[1], [0], [0], [1], [0, 0, 1, 1], [], []>} : vector<16x64xf32>, vector<64x128xf32>, vector<16x128xf32> -> vector<16x128xf32>
    %18 = vector.broadcast %16 : vector<1x128xf32> to vector<16x128xf32>
    %19 = arith.addf %17, %18 : vector<16x128xf32>
    %cst_17 = arith.constant dense<0xFF800000> : vector<16xf32>
    %20 = vector.multi_reduction <maximumf>, %19, %cst_17 [1] : vector<16x128xf32> to vector<16xf32>
    %21 = vector.shape_cast %20 : vector<16xf32> to vector<16x1xf32>
    %22 = vector.broadcast %21 : vector<16x1xf32> to vector<16x128xf32>
    %23 = arith.subf %19, %22 : vector<16x128xf32>
    %24 = math.exp %23 : vector<16x128xf32>
    %cst_18 = arith.constant dense<0.000000e+00> : vector<16xf32>
    %25 = vector.multi_reduction <add>, %24, %cst_18 [1] : vector<16x128xf32> to vector<16xf32>
    %26 = vector.shape_cast %25 : vector<16xf32> to vector<16x1xf32>
    %27 = math.log %26 : vector<16x1xf32>
    %28 = arith.addf %27, %21 : vector<16x1xf32>
    %29 = vector.broadcast %28 : vector<16x1xf32> to vector<16x128xf32>
    %30 = arith.subf %19, %29 : vector<16x128xf32>
    %c0_19 = arith.constant 0 : index
    %c0_20 = arith.constant 0 : index
    %31 = vector.load %arg8[%c0_19, %c0_20] : memref<16x128xf32, #tpu.memory_space<vmem>>, vector<16x128xf32>
    tpu.vector_store %arg8[%c0_19, %c0_20], %30 {strides = array<i32>} : memref<16x128xf32, #tpu.memory_space<vmem>>, vector<16x128xf32>,
    return
  }
  func.func @transform_0(%arg0: i32) -> (i32, i32) {
    %c0_i32 = arith.constant 0 : i32
    %c0_i32_0 = arith.constant 0 : i32
    return %arg0, %c0_i32 : i32, i32
  }
  func.func @transform_1(%arg0: i32) -> (i32, i32) {
    %c0_i32 = arith.constant 0 : i32
    %c0_i32_0 = arith.constant 0 : i32
    %c0_i32_1 = arith.constant 0 : i32
    return %c0_i32, %c0_i32_0 : i32, i32
  }
  func.func @transform_2(%arg0: i32) -> (i32, i32) {
    %c0_i32 = arith.constant 0 : i32
    %c0_i32_0 = arith.constant 0 : i32
    %c0_i32_1 = arith.constant 0 : i32
    return %c0_i32, %c0_i32_0 : i32, i32
  }
  func.func @transform_3(%arg0: i32) -> (i32, i32) {
    %c0_i32 = arith.constant 0 : i32
    %c0_i32_0 = arith.constant 0 : i32
    %c0_i32_1 = arith.constant 0 : i32
    return %c0_i32, %c0_i32_0 : i32, i32
  }
  func.func @transform_4(%arg0: i32) -> (i32, i32) {
    %c0_i32 = arith.constant 0 : i32
    %c0_i32_0 = arith.constant 0 : i32
    %c0_i32_1 = arith.constant 0 : i32
    return %c0_i32, %c0_i32_0 : i32, i32
  }
  func.func @transform_5(%arg0: i32) -> (i32, i32) {
    %c0_i32 = arith.constant 0 : i32
    %c0_i32_0 = arith.constant 0 : i32
    %c0_i32_1 = arith.constant 0 : i32
    return %c0_i32, %c0_i32_0 : i32, i32
  }
  func.func @transform_6(%arg0: i32) -> (i32, i32) {
    %c0_i32 = arith.constant 0 : i32
    %c0_i32_0 = arith.constant 0 : i32
    %c0_i32_1 = arith.constant 0 : i32
    return %c0_i32, %c0_i32_0 : i32, i32
  }
  func.func @transform_7(%arg0: i32) -> (i32, i32) {
    %c0_i32 = arith.constant 0 : i32
    %c0_i32_0 = arith.constant 0 : i32
    return %arg0, %c0_i32 : i32, i32
  }
}

</mosaic_0001>

<llo_original>
// kernel: tpu_custom_call.1
$region0: #{tpu_custom_call.1}
  #allocation0 [shape = 'u32[]', space=smem, size = 0x4, offset = 0x4, fixed_abs, tag = 'smem constant byte address 0x4 - core index']
  #allocation1 [shape = 'u32[144,128]{1,0:T(1,128)}', space=vmem, size = 0x12000, scoped, tag = 'internal scratch']
  %s0 = inlined_call_operand.hbm [shape: f32[16,32], index: 0, kind: input, shape index: {}]
  %s1 = inlined_call_operand.hbm [shape: f32[32,64], index: 1, kind: input, shape index: {}]
  %s2 = inlined_call_operand.vmem [shape: f32[1,64], index: 2, kind: input, shape index: {}]
  %s3 = inlined_call_operand.hbm [shape: f32[64,64], index: 3, kind: input, shape index: {}]
  %s4 = inlined_call_operand.vmem [shape: f32[1,64], index: 4, kind: input, shape index: {}]
  %s5 = inlined_call_operand.hbm [shape: f32[64,128], index: 5, kind: input, shape index: {}]
  %s6 = inlined_call_operand.vmem [shape: f32[1,128], index: 6, kind: input, shape index: {}]
  %s7 = inlined_call_operand.hbm [shape: f32[16,128], index: 7, kind: output, shape index: {}]
  %s8 = sld [smem:[#allocation0]]
  $region54: #{tpu_custom_call.1} parent=0
    _
  %s10 = ssub.s32 1, %s8
  %s11 = scalar_select 0, %s10, %s8
  $region1: #{tpu_custom_call.1} parent=0
    #allocation2 [shape = 'u8[8192]{0}', space=vmem, size = 0x2000, scoped, tag = 'input window, operand 0, single buffered']
    #allocation3 [shape = 's32[1]{0}', space=sflag, size = 0x4, scoped, tag = 'scoped memory for tpu_custom_call.1']
    #allocation4 [shape = 's32[1]{0}', space=sflag, size = 0x4, scoped, tag = 'scoped memory for tpu_custom_call.1']
    #allocation5 [shape = 'u8[16384]{0}', space=vmem, size = 0x4000, scoped, tag = 'input window, operand 1, single buffered']
    #allocation6 [shape = 's32[1]{0}', space=sflag, size = 0x4, scoped, tag = 'scoped memory for tpu_custom_call.1']
    #allocation7 [shape = 'u8[32768]{0}', space=vmem, size = 0x8000, scoped, tag = 'input window, operand 3, single buffered']
    #allocation8 [shape = 'u8[32768]{0}', space=vmem, size = 0x8000, scoped, tag = 'input window, operand 5, single buffered']
    #allocation9 [shape = 's32[1]{0}', space=sflag, size = 0x4, scoped, tag = 'scoped memory for tpu_custom_call.1']
    #allocation10 [shape = 'u8[8192]{0}', space=vmem, size = 0x2000, scoped, tag = 'output window, operand 0, single buffered']
    %12 = vsyncpa [#allocation3], 0
    %13 = vsyncpa [#allocation6], 0
    %14 = vsyncpa [#allocation9], 0
    %15 = vsyncpa [#allocation4], 0
    // Predicated region
    $region2: #{tpu_custom_call.1} parent=1 // pred_check
      _
    $region3: #{tpu_custom_call.1} parent=1 // pred_check_branch
      %17 = sbr.rel (0) target = $region5
    $region4: #{tpu_custom_call.1} parent=1 // pred_region
      %s19 = ssub.s32 256, 256
      %20 = vsyncadd [#allocation3], %s19
      %s21 = sshll.u32 [#allocation2], 4
      %s22 = int_to_ptr.vmem [resolvable:$true] %s21
      %27 = dma.hbm_to_vmem [thread:$0]  %s0, 256, %s22, [#allocation3], 128, 128, 8
    $region5: #{tpu_custom_call.1} parent=1 // pred_fallthru
      _
    // Predicated region
    $region6: #{tpu_custom_call.1} parent=1 // pred_check
      _
    $region7: #{tpu_custom_call.1} parent=1 // pred_check_branch
      %29 = sbr.rel (0) target = $region9
    $region8: #{tpu_custom_call.1} parent=1 // pred_region
      %s31 = ssub.s32 512, 512
      %32 = vsyncadd [#allocation6], %s31
      %s33 = sshll.u32 [#allocation5], 4
      %s34 = int_to_ptr.vmem [resolvable:$true] %s33
      %39 = dma.hbm_to_vmem [thread:$0]  %s1, 512, %s34, [#allocation6], 128, 128, 8
    $region9: #{tpu_custom_call.1} parent=1 // pred_fallthru
      _
    // Predicated region
    $region10: #{tpu_custom_call.1} parent=1 // pred_check
      _
    $region11: #{tpu_custom_call.1} parent=1 // pred_check_branch
      %41 = sbr.rel (0) target = $region13
    $region12: #{tpu_custom_call.1} parent=1 // pred_region
      _
    $region13: #{tpu_custom_call.1} parent=1 // pred_fallthru
      _
    // Predicated region
    $region14: #{tpu_custom_call.1} parent=1 // pred_check
      _
    $region15: #{tpu_custom_call.1} parent=1 // pred_check_branch
      %43 = sbr.rel (0) target = $region17
    $region16: #{tpu_custom_call.1} parent=1 // pred_region
      %s45 = ssub.s32 1024, 1024
      %46 = vsyncadd [#allocation6], %s45
      %s47 = sshll.u32 [#allocation7], 4
      %s48 = int_to_ptr.vmem [resolvable:$true] %s47
      %53 = dma.hbm_to_vmem [thread:$0]  %s3, 1024, %s48, [#allocation6], 128, 128, 8
    $region17: #{tpu_custom_call.1} parent=1 // pred_fallthru
      _
    // Predicated region
    $region18: #{tpu_custom_call.1} parent=1 // pred_check
      _
    $region19: #{tpu_custom_call.1} parent=1 // pred_check_branch
      %55 = sbr.rel (0) target = $region21
    $region20: #{tpu_custom_call.1} parent=1 // pred_region
      _
    $region21: #{tpu_custom_call.1} parent=1 // pred_fallthru
      _
    // Predicated region
    $region22: #{tpu_custom_call.1} parent=1 // pred_check
      _
    $region23: #{tpu_custom_call.1} parent=1 // pred_check_branch
      %57 = sbr.rel (0) target = $region25
    $region24: #{tpu_custom_call.1} parent=1 // pred_region
      %s59 = ssub.s32 1024, 1024
      %60 = vsyncadd [#allocation9], %s59
      %s61 = sshll.u32 [#allocation8], 4
      %s62 = int_to_ptr.vmem [resolvable:$true] %s61
      %67 = dma.hbm_to_vmem [thread:$0]  %s5, 1024, %s62, [#allocation9], 128, 128, 8
    $region25: #{tpu_custom_call.1} parent=1 // pred_fallthru
      _
    // Predicated region
    $region26: #{tpu_custom_call.1} parent=1 // pred_check
      _
    $region27: #{tpu_custom_call.1} parent=1 // pred_check_branch
      %69 = sbr.rel (0) target = $region29
    $region28: #{tpu_custom_call.1} parent=1 // pred_region
      _
    $region29: #{tpu_custom_call.1} parent=1 // pred_fallthru
      _
    // Predicated region
    $region30: #{tpu_custom_call.1} parent=1 // pred_check
      _
    $region31: #{tpu_custom_call.1} parent=1 // pred_check_branch
      %71 = sbr.rel (0) target = $region33
    $region32: #{tpu_custom_call.1} parent=1 // pred_region
      %72 = dma.done [#allocation3], 256
    $region33: #{tpu_custom_call.1} parent=1 // pred_fallthru
      _
    // Predicated region
    $region34: #{tpu_custom_call.1} parent=1 // pred_check
      _
    $region35: #{tpu_custom_call.1} parent=1 // pred_check_branch
      %74 = sbr.rel (0) target = $region37
    $region36: #{tpu_custom_call.1} parent=1 // pred_region
      %75 = dma.done [#allocation6], 512
    $region37: #{tpu_custom_call.1} parent=1 // pred_fallthru
      _
    // Predicated region
    $region38: #{tpu_custom_call.1} parent=1 // pred_check
      _
    $region39: #{tpu_custom_call.1} parent=1 // pred_check_branch
      %77 = sbr.rel (0) target = $region41
    $region40: #{tpu_custom_call.1} parent=1 // pred_region
      %78 = dma.done [#allocation6], 1024
    $region41: #{tpu_custom_call.1} parent=1 // pred_fallthru
      _
    // Predicated region
    $region42: #{tpu_custom_call.1} parent=1 // pred_check
      _
    $region43: #{tpu_custom_call.1} parent=1 // pred_check_branch
      %80 = sbr.rel (0) target = $region45
    $region44: #{tpu_custom_call.1} parent=1 // pred_region
      %81 = dma.done [#allocation9], 1024
    $region45: #{tpu_custom_call.1} parent=1 // pred_fallthru
      _
    %v82 = vld [vmem:[#allocation2] sm:$0xff]
    %v83 = vld [vmem:[#allocation2 + $0x8] sm:$0xff]
    %v84 = vld [vmem:[#allocation5] sm:$0xff]
    %v85 = vld [vmem:[#allocation5 + $0x8] sm:$0xff]
    %v86 = vld [vmem:[#allocation5 + $0x10] sm:$0xff]
    %v87 = vld [vmem:[#allocation5 + $0x18] sm:$0xff]
    %v88 = vld [vmem:[%s2] sm:$0x1]
    %v90 = vlaneseq
    %v91 = vshrl.u32 %v90, 7
    %v92 = vsub.s32 0, %v91
    %v93 = vrot.slane %v88, %v92
    %vm95 = vcmask 261120
    %v97 = vsel %vm95, %v82, 0
    %v100 = vsel %vm95, %v83, 0
    %102 = vmatprep.subr.mxu0 0.0
    %103 = vmatpush1.msra.mxu0 0.0
    %104 = vmatprep.subr.mxu0 0.0
    %105 = vmatpush1.msra.mxu0 0.0
    %106 = vmatprep.subr.mxu0 0.0
    %107 = vmatpush1.msra.mxu0 0.0
    %108 = vmatprep.subr.mxu0 0.0
    %109 = vmatpush1.msra.mxu0 0.0
    %110 = vmatprep.subr.mxu0 0.0
    %111 = vmatpush1.msra.mxu0 0.0
    %112 = vmatprep.subr.mxu0 0.0
    %113 = vmatpush1.msra.mxu0 0.0
    %114 = vmatprep.subr.mxu0 0.0
    %115 = vmatpush1.msra.mxu0 0.0
    %116 = vmatprep.subr.mxu0 0.0
    %117 = vmatpush1.msra.mxu0 0.0
    %118 = vmatprep.subr.mxu0 0.0
    %119 = vmatpush1.msra.mxu0 0.0
    %120 = vmatprep.subr.mxu0 0.0
    %121 = vmatpush1.msra.mxu0 0.0
    %122 = vmatprep.subr.mxu0 0.0
    %123 = vmatpush1.msra.mxu0 0.0
    %124 = vmatprep.subr.mxu0 0.0
    %125 = vmatpush1.msra.mxu0 0.0
    %126 = vmatprep.subr.mxu0 0.0
    %127 = vmatpush1.msra.mxu0 %v87
    %128 = vmatprep.subr.mxu0 0.0
    %129 = vmatpush1.msra.mxu0 %v86
    %130 = vmatprep.subr.mxu0 0.0
    %131 = vmatpush1.msra.mxu0 %v85
    %132 = vmatprep.subr.mxu0 0.0
    %133 = vmatpush1.msra.mxu0 %v84
    %134 = vmatprep.subr.mxu0 0.0
    %135 = vmatpush2.msra.mxu0 0.0
    %136 = vmatprep.subr.mxu0 0.0
    %137 = vmatpush2.msra.mxu0 0.0
    %138 = vmatprep.subr.mxu0 0.0
    %139 = vmatpush2.msra.mxu0 0.0
    %140 = vmatprep.subr.mxu0 0.0
    %141 = vmatpush2.msra.mxu0 0.0
    %142 = vmatprep.subr.mxu0 0.0
    %143 = vmatpush2.msra.mxu0 0.0
    %144 = vmatprep.subr.mxu0 0.0
    %145 = vmatpush2.msra.mxu0 0.0
    %146 = vmatprep.subr.mxu0 0.0
    %147 = vmatpush2.msra.mxu0 0.0
    %148 = vmatprep.subr.mxu0 0.0
    %149 = vmatpush2.msra.mxu0 0.0
    %150 = vmatprep.subr.mxu0 0.0
    %151 = vmatpush2.msra.mxu0 0.0
    %152 = vmatprep.subr.mxu0 0.0
    %153 = vmatpush2.msra.mxu0 0.0
    %154 = vmatprep.subr.mxu0 0.0
    %155 = vmatpush2.msra.mxu0 0.0
    %156 = vmatprep.subr.mxu0 0.0
    %157 = vmatpush2.msra.mxu0 0.0
    %158 = vmatprep.subr.mxu0 0.0
    %159 = vmatpush2.msra.mxu0 0.0
    %160 = vmatprep.subr.mxu0 0.0
    %161 = vmatpush2.msra.mxu0 0.0
    %162 = vmatprep.subr.mxu0 0.0
    %163 = vmatpush2.msra.mxu0 0.0
    %164 = vmatprep.subr.mxu0 0.0
    %165 = vmatpush2.msra.mxu0 0.0
    %166 = vmatprep.mubr.f32.mxu0 0.0
    %167 = vmatmul.mubr.f32.gmra.mxu0 %v97
    %v168 = vpop.f32.mrf.mxu0
    %v169 = vadd.f32 %v93, %v168
    %v170 = vpop.f32.mrf.mxu0
    %171 = vmatprep.mubr.f32.mxu0 0.0
    %172 = vmatmul.mubr.f32.gmra.mxu0 %v100
    %v173 = vpop.f32.mrf.mxu0
    %v174 = vadd.f32 %v93, %v173
    %v175 = vpop.f32.mrf.mxu0
    %176 = vdwg.mxu0
    %v177 = vmax.f32 %v169, 0.0
    %v178 = vmax.f32 %v174, 0.0
    %v179 = vld [vmem:[#allocation7] sm:$0xff]
    %v180 = vld [vmem:[#allocation7 + $0x8] sm:$0xff]
    %v181 = vld [vmem:[#allocation7 + $0x10] sm:$0xff]
    %v182 = vld [vmem:[#allocation7 + $0x18] sm:$0xff]
    %v183 = vld [vmem:[#allocation7 + $0x20] sm:$0xff]
    %v184 = vld [vmem:[#allocation7 + $0x28] sm:$0xff]
    %v185 = vld [vmem:[#allocation7 + $0x30] sm:$0xff]
    %v186 = vld [vmem:[#allocation7 + $0x38] sm:$0xff]
    %v187 = vld [vmem:[%s4] sm:$0x1]
    %v189 = vlaneseq
    %v190 = vshrl.u32 %v189, 7
    %v191 = vsub.s32 0, %v190
    %v192 = vrot.slane %v187, %v191
    %vm194 = vcmask 523264
    %v196 = vsel %vm194, %v177, 0
    %v199 = vsel %vm194, %v178, 0
    %201 = vmatprep.subr.mxu0 0.0
    %202 = vmatpush1.msra.mxu0 0.0
    %203 = vmatprep.subr.mxu0 0.0
    %204 = vmatpush1.msra.mxu0 0.0
    %205 = vmatprep.subr.mxu0 0.0
    %206 = vmatpush1.msra.mxu0 0.0
    %207 = vmatprep.subr.mxu0 0.0
    %208 = vmatpush1.msra.mxu0 0.0
    %209 = vmatprep.subr.mxu0 0.0
    %210 = vmatpush1.msra.mxu0 0.0
    %211 = vmatprep.subr.mxu0 0.0
    %212 = vmatpush1.msra.mxu0 0.0
    %213 = vmatprep.subr.mxu0 0.0
    %214 = vmatpush1.msra.mxu0 0.0
    %215 = vmatprep.subr.mxu0 0.0
    %216 = vmatpush1.msra.mxu0 0.0
    %217 = vmatprep.subr.mxu0 0.0
    %218 = vmatpush1.msra.mxu0 %v186
    %219 = vmatprep.subr.mxu0 0.0
    %220 = vmatpush1.msra.mxu0 %v185
    %221 = vmatprep.subr.mxu0 0.0
    %222 = vmatpush1.msra.mxu0 %v184
    %223 = vmatprep.subr.mxu0 0.0
    %224 = vmatpush1.msra.mxu0 %v183
    %225 = vmatprep.subr.mxu0 0.0
    %226 = vmatpush1.msra.mxu0 %v182
    %227 = vmatprep.subr.mxu0 0.0
    %228 = vmatpush1.msra.mxu0 %v181
    %229 = vmatprep.subr.mxu0 0.0
    %230 = vmatpush1.msra.mxu0 %v180
    %231 = vmatprep.subr.mxu0 0.0
    %232 = vmatpush1.msra.mxu0 %v179
    %233 = vmatprep.subr.mxu0 0.0
    %234 = vmatpush2.msra.mxu0 0.0
    %235 = vmatprep.subr.mxu0 0.0
    %236 = vmatpush2.msra.mxu0 0.0
    %237 = vmatprep.subr.mxu0 0.0
    %238 = vmatpush2.msra.mxu0 0.0
    %239 = vmatprep.subr.mxu0 0.0
    %240 = vmatpush2.msra.mxu0 0.0
    %241 = vmatprep.subr.mxu0 0.0
    %242 = vmatpush2.msra.mxu0 0.0
    %243 = vmatprep.subr.mxu0 0.0
    %244 = vmatpush2.msra.mxu0 0.0
    %245 = vmatprep.subr.mxu0 0.0
    %246 = vmatpush2.msra.mxu0 0.0
    %247 = vmatprep.subr.mxu0 0.0
    %248 = vmatpush2.msra.mxu0 0.0
    %249 = vmatprep.subr.mxu0 0.0
    %250 = vmatpush2.msra.mxu0 0.0
    %251 = vmatprep.subr.mxu0 0.0
    %252 = vmatpush2.msra.mxu0 0.0
    %253 = vmatprep.subr.mxu0 0.0
    %254 = vmatpush2.msra.mxu0 0.0
    %255 = vmatprep.subr.mxu0 0.0
    %256 = vmatpush2.msra.mxu0 0.0
    %257 = vmatprep.subr.mxu0 0.0
    %258 = vmatpush2.msra.mxu0 0.0
    %259 = vmatprep.subr.mxu0 0.0
    %260 = vmatpush2.msra.mxu0 0.0
    %261 = vmatprep.subr.mxu0 0.0
    %262 = vmatpush2.msra.mxu0 0.0
    %263 = vmatprep.subr.mxu0 0.0
    %264 = vmatpush2.msra.mxu0 0.0
    %265 = vmatprep.mubr.f32.mxu0 0.0
    %266 = vmatmul.mubr.f32.gmra.mxu0 %v196
    %v267 = vpop.f32.mrf.mxu0
    %v268 = vadd.f32 %v192, %v267
    %v269 = vpop.f32.mrf.mxu0
    %270 = vmatprep.mubr.f32.mxu0 0.0
    %271 = vmatmul.mubr.f32.gmra.mxu0 %v199
    %v272 = vpop.f32.mrf.mxu0
    %v273 = vadd.f32 %v192, %v272
    %v274 = vpop.f32.mrf.mxu0
    %275 = vdwg.mxu0
    %v276 = vmax.f32 %v268, 0.0
    %v277 = vmax.f32 %v273, 0.0
    %v278 = vld [vmem:[#allocation8] sm:$0xff]
    %v279 = vld [vmem:[#allocation8 + $0x8] sm:$0xff]
    %v280 = vld [vmem:[#allocation8 + $0x10] sm:$0xff]
    %v281 = vld [vmem:[#allocation8 + $0x18] sm:$0xff]
    %v282 = vld [vmem:[#allocation8 + $0x20] sm:$0xff]
    %v283 = vld [vmem:[#allocation8 + $0x28] sm:$0xff]
    %v284 = vld [vmem:[#allocation8 + $0x30] sm:$0xff]
    %v285 = vld [vmem:[#allocation8 + $0x38] sm:$0xff]
    %v286 = vld [vmem:[%s6] sm:$0x1]
    %v288 = vlaneseq
    %v289 = vshrl.u32 %v288, 7
    %v290 = vsub.s32 0, %v289
    %v291 = vrot.slane %v286, %v290
    %v294 = vsel %vm194, %v276, 0
    %v297 = vsel %vm194, %v277, 0
    %299 = vmatprep.subr.mxu0 0.0
    %300 = vmatpush1.msra.mxu0 0.0
    %301 = vmatprep.subr.mxu0 0.0
    %302 = vmatpush1.msra.mxu0 0.0
    %303 = vmatprep.subr.mxu0 0.0
    %304 = vmatpush1.msra.mxu0 0.0
    %305 = vmatprep.subr.mxu0 0.0
    %306 = vmatpush1.msra.mxu0 0.0
    %307 = vmatprep.subr.mxu0 0.0
    %308 = vmatpush1.msra.mxu0 0.0
    %309 = vmatprep.subr.mxu0 0.0
    %310 = vmatpush1.msra.mxu0 0.0
    %311 = vmatprep.subr.mxu0 0.0
    %312 = vmatpush1.msra.mxu0 0.0
    %313 = vmatprep.subr.mxu0 0.0
    %314 = vmatpush1.msra.mxu0 0.0
    %315 = vmatprep.subr.mxu0 0.0
    %316 = vmatpush1.msra.mxu0 %v285
    %317 = vmatprep.subr.mxu0 0.0
    %318 = vmatpush1.msra.mxu0 %v284
    %319 = vmatprep.subr.mxu0 0.0
    %320 = vmatpush1.msra.mxu0 %v283
    %321 = vmatprep.subr.mxu0 0.0
    %322 = vmatpush1.msra.mxu0 %v282
    %323 = vmatprep.subr.mxu0 0.0
    %324 = vmatpush1.msra.mxu0 %v281
    %325 = vmatprep.subr.mxu0 0.0
    %326 = vmatpush1.msra.mxu0 %v280
    %327 = vmatprep.subr.mxu0 0.0
    %328 = vmatpush1.msra.mxu0 %v279
    %329 = vmatprep.subr.mxu0 0.0
    %330 = vmatpush1.msra.mxu0 %v278
    %331 = vmatprep.subr.mxu0 0.0
    %332 = vmatpush2.msra.mxu0 0.0
    %333 = vmatprep.subr.mxu0 0.0
    %334 = vmatpush2.msra.mxu0 0.0
    %335 = vmatprep.subr.mxu0 0.0
    %336 = vmatpush2.msra.mxu0 0.0
    %337 = vmatprep.subr.mxu0 0.0
    %338 = vmatpush2.msra.mxu0 0.0
    %339 = vmatprep.subr.mxu0 0.0
    %340 = vmatpush2.msra.mxu0 0.0
    %341 = vmatprep.subr.mxu0 0.0
    %342 = vmatpush2.msra.mxu0 0.0
    %343 = vmatprep.subr.mxu0 0.0
    %344 = vmatpush2.msra.mxu0 0.0
    %345 = vmatprep.subr.mxu0 0.0
    %346 = vmatpush2.msra.mxu0 0.0
    %347 = vmatprep.subr.mxu0 0.0
    %348 = vmatpush2.msra.mxu0 0.0
    %349 = vmatprep.subr.mxu0 0.0
    %350 = vmatpush2.msra.mxu0 0.0
    %351 = vmatprep.subr.mxu0 0.0
    %352 = vmatpush2.msra.mxu0 0.0
    %353 = vmatprep.subr.mxu0 0.0
    %354 = vmatpush2.msra.mxu0 0.0
    %355 = vmatprep.subr.mxu0 0.0
    %356 = vmatpush2.msra.mxu0 0.0
    %357 = vmatprep.subr.mxu0 0.0
    %358 = vmatpush2.msra.mxu0 0.0
    %359 = vmatprep.subr.mxu0 0.0
    %360 = vmatpush2.msra.mxu0 0.0
    %361 = vmatprep.subr.mxu0 0.0
    %362 = vmatpush2.msra.mxu0 0.0
    %363 = vmatprep.mubr.f32.mxu0 0.0
    %364 = vmatmul.mubr.f32.gmra.mxu0 %v294
    %v365 = vpop.f32.mrf.mxu0
    %v366 = vadd.f32 %v291, %v365
    %v367 = vpop.f32.mrf.mxu0
    %368 = vmatprep.mubr.f32.mxu0 0.0
    %369 = vmatmul.mubr.f32.gmra.mxu0 %v297
    %v370 = vpop.f32.mrf.mxu0
    %v371 = vadd.f32 %v291, %v370
    %v372 = vpop.f32.mrf.mxu0
    %373 = vdwg.mxu0
    %374 = vmax.xlane.f32.xlu0 %v366
    %v375 = vpop.xlane.xlu0 %374
    %376 = vmax.xlane.f32.xlu0 %v371
    %v377 = vpop.xlane.xlu0 %376
    %v378 = vsub.f32 %v366, %v375
    %v379 = vsub.f32 %v371, %v377
    %v380 = vmul.f32 %v378, 1.442695
    %v381 = vpow.pop %v380
    %v382 = vmul.f32 %v379, 1.442695
    %v383 = vpow.pop %v382
    %384 = vadd.xlane.f32.xlu0 %v381
    %v385 = vpop.xlane.xlu0 %384
    %386 = vadd.xlane.f32.xlu0 %v383
    %v387 = vpop.xlane.xlu0 %386
    %v388 = vlog2.pop %v385
    %v389 = vmul.f32 %v388, 0.6931472
    %v390 = vlog2.pop %v387
    %v391 = vmul.f32 %v390, 0.6931472
    %v392 = vadd.f32 %v389, %v375
    %v393 = vadd.f32 %v391, %v377
    %v394 = vsub.f32 %v366, %v392
    %v395 = vsub.f32 %v371, %v393
    %396 = vst [vmem:[#allocation10] sm:$0xff] %v394
    %397 = vst [vmem:[#allocation10 + $0x8] sm:$0xff] %v395
    // Predicated region
    $region46: #{tpu_custom_call.1} parent=1 // pred_check
      _
    $region47: #{tpu_custom_call.1} parent=1 // pred_check_branch
      %399 = sbr.rel (0) target = $region49
    $region48: #{tpu_custom_call.1} parent=1 // pred_region
      %s401 = ssub.s32 256, 256
      %402 = vsyncadd [#allocation4], %s401
      %s403 = sshll.u32 [#allocation10], 4
      %s404 = int_to_ptr.vmem [resolvable:$true] %s403
      %409 = dma.vmem_to_hbm [thread:$0]  %s404, 256, %s7, [#allocation4], 128, 128, 8
    $region49: #{tpu_custom_call.1} parent=1 // pred_fallthru
      _
    // Predicated region
    $region50: #{tpu_custom_call.1} parent=1 // pred_check
      _
    $region51: #{tpu_custom_call.1} parent=1 // pred_check_branch
      %411 = sbr.rel (0) target = $region53
    $region52: #{tpu_custom_call.1} parent=1 // pred_region
      %412 = dma.done [#allocation4], 256
    $region53: #{tpu_custom_call.1} parent=1 // pred_fallthru
      _
    %413 = vsyncpa [#allocation3], 1
    %414 = vsyncpa [#allocation6], 1
    %415 = vsyncpa [#allocation9], 1
    %416 = vsyncpa [#allocation4], 1

</llo_original>
